<compile_context>
chip_gen: v6e
topology: v6e:2x2x1
jax: 0.10.0
libtpu: 0.0.40
codegen_flags: <defaults>
</compile_context>

<pallas_src>
import functools

import numpy as np
import jax
import jax.numpy as jnp
from jax import lax
from jax.experimental import pallas as pl
from jax.experimental.pallas import tpu as pltpu


# ------------------------------ fused kernel ------------------------------- #

def fused_attention_kernel(x_ref, wqkv_ref, wout_ref, bout_ref, o_ref, merged_ref, *,
                           heads, dim_head, scale, compute_dtype, approx_recip):
    # x_ref:      (1, N, D)     native dtype (cast to compute_dtype in VMEM)
    # wqkv_ref:   (D, 3*inner)  compute_dtype (resident across the grid)
    # wout_ref:   (inner, D)    compute_dtype (resident across the grid)
    # bout_ref:   (1, D)        f32           (resident across the grid)
    # o_ref:      (1, N, D)     out dtype
    # merged_ref: (N, inner)    compute_dtype VMEM scratch (head-merged attn output)
    inner = heads * dim_head
    cd = compute_dtype

    x = x_ref[0].astype(cd)                                        # (N, D)

    # 1) QKV projection: single lane-dense MXU matmul, f32 accumulation.
    qkv = lax.dot_general(
        x, wqkv_ref[...],
        dimension_numbers=(((1,), (0,)), ((), ())),
        preferred_element_type=jnp.float32)                        # (N, 3*inner) f32

    # Fold the softmax scale into q while still f32, then cast the slab to
    # compute_dtype ONCE (softmax statistics stay f32 below).
    q_slab = (qkv[:, :inner] * scale).astype(cd)                   # (N, inner)
    k_slab = qkv[:, inner:2 * inner].astype(cd)                    # (N, inner)
    v_slab = qkv[:, 2 * inner:].astype(cd)                         # (N, inner)

    # 2) Per-head attention. Heads are static lane slices of the VMEM slabs; the
    #    loop is unrolled and each iteration retires into the merged scratch so
    #    only e / sum_e are live per head.
    for h in range(heads):
        lo = h * dim_head
        hi = lo + dim_head
        q = q_slab[:, lo:hi]                                       # (N, dh) cd
        k = k_slab[:, lo:hi]                                       # (N, dh) cd
        v = v_slab[:, lo:hi]                                       # (N, dh) cd

        # q @ k^T without materializing a transposed copy of k.
        dots = lax.dot_general(
            q, k, dimension_numbers=(((1,), (1,)), ((), ())),
            preferred_element_type=jnp.float32)                    # (N, N) f32

        # max-subtracted softmax numerator / denominator in f32.
        m = jnp.max(dots, axis=-1, keepdims=True)
        e = jnp.exp(dots - m)                                      # (N, N) f32, <= 1
        denom = jnp.sum(e, axis=-1, keepdims=True)                 # (N, 1) f32

        # PV first, normalize after (N*dh multiplies instead of N*N).
        pv = lax.dot_general(
            e.astype(cd), v, dimension_numbers=(((1,), (0,)), ((), ())),
            preferred_element_type=jnp.float32)                    # (N, dh) f32
        out_h = pv * pl.reciprocal(denom, approx=approx_recip)

        # Head merge = static lane-offset store into the (N, inner) scratch.
        merged_ref[:, lo:hi] = out_h.astype(cd)

    # 3) ONE full-contraction-depth output projection + bias.
    y = lax.dot_general(
        merged_ref[...], wout_ref[...],
        dimension_numbers=(((1,), (0,)), ((), ())),
        preferred_element_type=jnp.float32)                        # (N, D) f32
    o_ref[0] = (y + bout_ref[...]).astype(o_ref.dtype)


# -------------------------------- wrapper ---------------------------------- #

def attention_forward(x, w_qkv_t, w_out_t, b_out, heads, *,
                      compute_dtype=jnp.float32, out_dtype=None):
    """x: (B, N, D); w_qkv_t: (D, 3*inner); w_out_t: (inner, D); b_out: (D,) or (1, D)."""
    B, N, D = x.shape
    inner3 = w_qkv_t.shape[1]
    inner = inner3 // 3
    dh = inner // heads
    scale = float(dh) ** -0.5
    cd = np.dtype(compute_dtype)
    out_dtype = np.dtype(x.dtype if out_dtype is None else out_dtype)

    if heads == 1 and dh == D:
        # TODO(synk): project_out=False path (to_out == nn.Identity) not implemented.
        raise NotImplementedError(
            "heads == 1 and dim_head == dim (Identity to_out) is not supported")

    # Weights are cast only if not already stored in compute_dtype (callers should
    # cache compute_dtype weights so this is a no-op per call). x stays native.
    wqkv_c = w_qkv_t if w_qkv_t.dtype == cd else w_qkv_t.astype(cd)
    wout_c = w_out_t if w_out_t.dtype == cd else w_out_t.astype(cd)
    bias = b_out.reshape(1, D).astype(jnp.float32)

    kernel = functools.partial(
        fused_attention_kernel,
        heads=heads, dim_head=dh, scale=scale, compute_dtype=cd,
        approx_recip=(cd != np.dtype(np.float32)))

    # Advisory cost estimate so XLA schedules around the custom call sensibly.
    flops = B * (2 * N * D * inner3 + 4 * N * N * inner + 2 * N * inner * D)
    transcendentals = B * heads * N * N
    bytes_accessed = (x.size * x.dtype.itemsize
                      + wqkv_c.size * wqkv_c.dtype.itemsize
                      + wout_c.size * wout_c.dtype.itemsize
                      + bias.size * 4
                      + B * N * D * out_dtype.itemsize)
    cost = pl.CostEstimate(flops=flops, transcendentals=transcendentals,
                           bytes_accessed=bytes_accessed)

    # Rough VMEM budget: double-buffered I/O blocks + resident weights + live temps.
    blk = 2 * N * D * x.dtype.itemsize                               # x block (2 bufs)
    blk += 2 * ((D * inner3 + inner * D) * cd.itemsize + D * 4)      # weights + bias
    blk += 2 * N * D * out_dtype.itemsize                            # output block
    tmp = N * inner3 * 4 + N * inner3 * cd.itemsize                  # qkv f32 + cd slabs
    tmp += 2 * N * N * 4 + N * D * 4                                 # dots/e + y
    tmp += N * inner * cd.itemsize                                   # merged scratch
    budget = int(1.5 * (blk + tmp)) + (4 << 20)
    # Cap at 64 MiB so the request stays valid on v7x (v5e/v6e have 128 MiB physical).
    vmem_limit = int(min(max(budget, 32 << 20), 64 << 20))

    # One grid step per batch element; weight blocks have constant index maps so
    # they stay resident in VMEM across the (parallel) grid.
    y = pl.pallas_call(
        kernel,
        out_shape=jax.ShapeDtypeStruct((B, N, D), out_dtype),
        grid=(B,),
        in_specs=[
            pl.BlockSpec((1, N, D), lambda b: (b, 0, 0)),
            pl.BlockSpec((D, inner3), lambda b: (0, 0)),
            pl.BlockSpec((inner, D), lambda b: (0, 0)),
            pl.BlockSpec((1, D), lambda b: (0, 0)),
        ],
        out_specs=pl.BlockSpec((1, N, D), lambda b: (b, 0, 0)),
        scratch_shapes=[pltpu.VMEM((N, inner), cd)],
        compiler_params=pltpu.CompilerParams(
            dimension_semantics=("parallel",),
            vmem_limit_bytes=vmem_limit),
        cost_estimate=cost,
    )(x, wqkv_c, wout_c, bias)
    return y


# ------------------------------- reference --------------------------------- #

def attention_reference(x, w_qkv_t, w_out_t, b_out, heads):
    B, N, D = x.shape
    inner = w_qkv_t.shape[1] // 3
    dh = inner // heads
    scale = float(dh) ** -0.5
    qkv = x @ w_qkv_t                                   # (B, N, 3*inner)
    q, k, v = jnp.split(qkv, 3, axis=-1)

    def split_heads(t):
        return t.reshape(B, N, heads, dh).transpose(0, 2, 1, 3)

    q, k, v = map(split_heads, (q, k, v))
    dots = jnp.einsum("bhnd,bhmd->bhnm", q, k) * scale
    attn = jax.nn.softmax(dots, axis=-1)
    out = jnp.einsum("bhnm,bhmd->bhnd", attn, v)
    out = out.transpose(0, 2, 1, 3).reshape(B, N, inner)
    return out @ w_out_t + b_out


# --------------------------------- main ------------------------------------ #

if __name__ == "__main__":
    # NOTE: toy shapes for correctness only; benchmark / tune at real ViT shapes
    # (N=197..1024 padded to a multiple of 8/128, D=768, dim_head=64).
    B, N = 2, 8             # batch, sequence length
    dim = 32                # model dim
    heads, dim_head = 4, 8
    inner = heads * dim_head  # 32

    key = jax.random.PRNGKey(0)
    kx, kq, kw, kb = jax.random.split(key, 4)

    x = jax.random.normal(kx, (B, N, dim), dtype=jnp.float32)

    # PyTorch Linear weights are (out_features, in_features); we pass transposed.
    w_qkv = jax.random.normal(kq, (inner * 3, dim), dtype=jnp.float32) * 0.05
    w_out = jax.random.normal(kw, (dim, inner), dtype=jnp.float32) * 0.05
    b_out = jax.random.normal(kb, (dim,), dtype=jnp.float32) * 0.05

    y_ref = attention_reference(x, w_qkv.T, w_out.T, b_out.reshape(1, dim), heads)

    # f32 compute path (exact reciprocal in the softmax normalization).
    y32 = attention_forward(x, w_qkv.T, w_out.T, b_out, heads,
                            compute_dtype=jnp.float32)
    y32 = jax.block_until_ready(y32)
    assert y32.shape == (B, N, dim)
    assert jnp.allclose(y32, y_ref, atol=2e-3, rtol=2e-3), "f32 mismatch vs reference"

    # bf16 matmuls with f32 accumulation and bf16 output (halves HBM writeback).
    ybf = attention_forward(x, w_qkv.T, w_out.T, b_out, heads,
                            compute_dtype=jnp.bfloat16, out_dtype=jnp.bfloat16)
    ybf = jax.block_until_ready(ybf)
    assert ybf.dtype == jnp.bfloat16
    assert jnp.allclose(ybf.astype(jnp.float32), y_ref, atol=5e-2, rtol=5e-2), \
        "bf16 mismatch vs reference"

    print("KERNEL_OK")
</pallas_src>

<mosaic_0001>
module attributes {stable_mosaic.version = 11 : i64} {
  func.func @fused_attention_kernel(%arg0: i32, %arg1: memref<1x8x32xf32, #tpu.memory_space<vmem>>, %arg2: memref<32x96xf32, #tpu.memory_space<vmem>>, %arg3: memref<32x32xf32, #tpu.memory_space<vmem>>, %arg4: memref<1x32xf32, #tpu.memory_space<vmem>>, %arg5: memref<1x8x32xf32, #tpu.memory_space<vmem>>, %arg6: memref<8x32xf32, #tpu.memory_space<vmem>>) attributes {dimension_semantics = [#tpu.dimension_semantics<parallel>], iteration_bounds = array<i64: 2>, scalar_prefetch = 0 : i64, scratch_operands = 1 : i64, tpu.core_type = #tpu.core_type<tc>, window_params = [{transform_indices = @transform_0, window_bounds = array<i64: 1, 8, 32>}, {pipeline_mode = #tpu.pipeline_mode<synchronous>, transform_indices = @transform_1, window_bounds = array<i64: 32, 96>}, {pipeline_mode = #tpu.pipeline_mode<synchronous>, transform_indices = @transform_2, window_bounds = array<i64: 32, 32>}, {pipeline_mode = #tpu.pipeline_mode<synchronous>, transform_indices = @transform_3, window_bounds = array<i64: 1, 32>}, {transform_indices = @transform_4, window_bounds = array<i64: 1, 8, 32>}]} {
    %c0 = arith.constant 0 : index
    %c0_0 = arith.constant 0 : index
    %c0_1 = arith.constant 0 : index
    %0 = vector.load %arg1[%c0, %c0_0, %c0_1] : memref<1x8x32xf32, #tpu.memory_space<vmem>>, vector<1x8x32xf32>
    %1 = vector.shape_cast %0 : vector<1x8x32xf32> to vector<8x32xf32>
    %c0_2 = arith.constant 0 : index
    %c0_3 = arith.constant 0 : index
    %2 = vector.load %arg2[%c0_2, %c0_3] : memref<32x96xf32, #tpu.memory_space<vmem>>, vector<32x96xf32>
    %cst = arith.constant dense<0.000000e+00> : vector<8x96xf32>
    %3 = tpu.matmul %1, %2, %cst {dimension_numbers = #tpu.dot_dimension_numbers<[1], [0], [0], [1], [0, 0, 1, 1], [], []>} : vector<8x32xf32>, vector<32x96xf32>, vector<8x96xf32> -> vector<8x96xf32>
    %4 = vector.extract_strided_slice %3 {offsets = [0, 0], sizes = [8, 32], strides = [1, 1]} : vector<8x96xf32> to vector<8x32xf32>
    %cst_4 = arith.constant 0.353553385 : f32
    %5 = vector.broadcast %cst_4 : f32 to vector<8x32xf32>
    %6 = arith.mulf %4, %5 : vector<8x32xf32>
    %7 = vector.extract_strided_slice %3 {offsets = [0, 32], sizes = [8, 32], strides = [1, 1]} : vector<8x96xf32> to vector<8x32xf32>
    %8 = vector.extract_strided_slice %3 {offsets = [0, 64], sizes = [8, 32], strides = [1, 1]} : vector<8x96xf32> to vector<8x32xf32>
    %9 = vector.extract_strided_slice %6 {offsets = [0, 0], sizes = [8, 8], strides = [1, 1]} : vector<8x32xf32> to vector<8x8xf32>
    %10 = vector.extract_strided_slice %7 {offsets = [0, 0], sizes = [8, 8], strides = [1, 1]} : vector<8x32xf32> to vector<8x8xf32>
    %11 = vector.extract_strided_slice %8 {offsets = [0, 0], sizes = [8, 8], strides = [1, 1]} : vector<8x32xf32> to vector<8x8xf32>
    %cst_5 = arith.constant dense<0.000000e+00> : vector<8x8xf32>
    %12 = tpu.matmul %9, %10, %cst_5 {dimension_numbers = #tpu.dot_dimension_numbers<[1], [1], [0], [0], [0, 0, 1, 0], [], []>} : vector<8x8xf32>, vector<8x8xf32>, vector<8x8xf32> -> vector<8x8xf32>
    %cst_6 = arith.constant dense<0xFF800000> : vector<8xf32>
    %13 = vector.multi_reduction <maximumf>, %12, %cst_6 [1] : vector<8x8xf32> to vector<8xf32>
    %14 = vector.shape_cast %13 : vector<8xf32> to vector<8x1xf32>
    %15 = vector.broadcast %14 : vector<8x1xf32> to vector<8x8xf32>
    %16 = arith.subf %12, %15 : vector<8x8xf32>
    %17 = math.exp %16 : vector<8x8xf32>
    %cst_7 = arith.constant dense<0.000000e+00> : vector<8xf32>
    %18 = vector.multi_reduction <add>, %17, %cst_7 [1] : vector<8x8xf32> to vector<8xf32>
    %19 = vector.shape_cast %18 : vector<8xf32> to vector<8x1xf32>
    %cst_8 = arith.constant dense<0.000000e+00> : vector<8x8xf32>
    %20 = tpu.matmul %17, %11, %cst_8 {dimension_numbers = #tpu.dot_dimension_numbers<[1], [0], [0], [1], [0, 0, 1, 1], [], []>} : vector<8x8xf32>, vector<8x8xf32>, vector<8x8xf32> -> vector<8x8xf32>
    %21 = tpu.reciprocal %19 : vector<8x1xf32> -> vector<8x1xf32>
    %22 = vector.broadcast %21 : vector<8x1xf32> to vector<8x8xf32>
    %23 = arith.mulf %20, %22 : vector<8x8xf32>
    %c0_9 = arith.constant 0 : index
    %c0_10 = arith.constant 0 : index
    %24 = vector.load %arg6[%c0_9, %c0_10] : memref<8x32xf32, #tpu.memory_space<vmem>>, vector<8x8xf32>
    tpu.vector_store %arg6[%c0_9, %c0_10], %23 {strides = array<i32>} : memref<8x32xf32, #tpu.memory_space<vmem>>, vector<8x8xf32>,
    %25 = vector.extract_strided_slice %6 {offsets = [0, 8], sizes = [8, 8], strides = [1, 1]} : vector<8x32xf32> to vector<8x8xf32>
    %26 = vector.extract_strided_slice %7 {offsets = [0, 8], sizes = [8, 8], strides = [1, 1]} : vector<8x32xf32> to vector<8x8xf32>
    %27 = vector.extract_strided_slice %8 {offsets = [0, 8], sizes = [8, 8], strides = [1, 1]} : vector<8x32xf32> to vector<8x8xf32>
    %cst_11 = arith.constant dense<0.000000e+00> : vector<8x8xf32>
    %28 = tpu.matmul %25, %26, %cst_11 {dimension_numbers = #tpu.dot_dimension_numbers<[1], [1], [0], [0], [0, 0, 1, 0], [], []>} : vector<8x8xf32>, vector<8x8xf32>, vector<8x8xf32> -> vector<8x8xf32>
    %cst_12 = arith.constant dense<0xFF800000> : vector<8xf32>
    %29 = vector.multi_reduction <maximumf>, %28, %cst_12 [1] : vector<8x8xf32> to vector<8xf32>
    %30 = vector.shape_cast %29 : vector<8xf32> to vector<8x1xf32>
    %31 = vector.broadcast %30 : vector<8x1xf32> to vector<8x8xf32>
    %32 = arith.subf %28, %31 : vector<8x8xf32>
    %33 = math.exp %32 : vector<8x8xf32>
    %cst_13 = arith.constant dense<0.000000e+00> : vector<8xf32>
    %34 = vector.multi_reduction <add>, %33, %cst_13 [1] : vector<8x8xf32> to vector<8xf32>
    %35 = vector.shape_cast %34 : vector<8xf32> to vector<8x1xf32>
    %cst_14 = arith.constant dense<0.000000e+00> : vector<8x8xf32>
    %36 = tpu.matmul %33, %27, %cst_14 {dimension_numbers = #tpu.dot_dimension_numbers<[1], [0], [0], [1], [0, 0, 1, 1], [], []>} : vector<8x8xf32>, vector<8x8xf32>, vector<8x8xf32> -> vector<8x8xf32>
    %37 = tpu.reciprocal %35 : vector<8x1xf32> -> vector<8x1xf32>
    %38 = vector.broadcast %37 : vector<8x1xf32> to vector<8x8xf32>
    %39 = arith.mulf %36, %38 : vector<8x8xf32>
    %c0_15 = arith.constant 0 : index
    %c8 = arith.constant 8 : index
    %40 = vector.load %arg6[%c0_15, %c8] : memref<8x32xf32, #tpu.memory_space<vmem>>, vector<8x8xf32>
    tpu.vector_store %arg6[%c0_15, %c8], %39 {strides = array<i32>} : memref<8x32xf32, #tpu.memory_space<vmem>>, vector<8x8xf32>,
    %41 = vector.extract_strided_slice %6 {offsets = [0, 16], sizes = [8, 8], strides = [1, 1]} : vector<8x32xf32> to vector<8x8xf32>
    %42 = vector.extract_strided_slice %7 {offsets = [0, 16], sizes = [8, 8], strides = [1, 1]} : vector<8x32xf32> to vector<8x8xf32>
    %43 = vector.extract_strided_slice %8 {offsets = [0, 16], sizes = [8, 8], strides = [1, 1]} : vector<8x32xf32> to vector<8x8xf32>
    %cst_16 = arith.constant dense<0.000000e+00> : vector<8x8xf32>
    %44 = tpu.matmul %41, %42, %cst_16 {dimension_numbers = #tpu.dot_dimension_numbers<[1], [1], [0], [0], [0, 0, 1, 0], [], []>} : vector<8x8xf32>, vector<8x8xf32>, vector<8x8xf32> -> vector<8x8xf32>
    %cst_17 = arith.constant dense<0xFF800000> : vector<8xf32>
    %45 = vector.multi_reduction <maximumf>, %44, %cst_17 [1] : vector<8x8xf32> to vector<8xf32>
    %46 = vector.shape_cast %45 : vector<8xf32> to vector<8x1xf32>
    %47 = vector.broadcast %46 : vector<8x1xf32> to vector<8x8xf32>
    %48 = arith.subf %44, %47 : vector<8x8xf32>
    %49 = math.exp %48 : vector<8x8xf32>
    %cst_18 = arith.constant dense<0.000000e+00> : vector<8xf32>
    %50 = vector.multi_reduction <add>, %49, %cst_18 [1] : vector<8x8xf32> to vector<8xf32>
    %51 = vector.shape_cast %50 : vector<8xf32> to vector<8x1xf32>
    %cst_19 = arith.constant dense<0.000000e+00> : vector<8x8xf32>
    %52 = tpu.matmul %49, %43, %cst_19 {dimension_numbers = #tpu.dot_dimension_numbers<[1], [0], [0], [1], [0, 0, 1, 1], [], []>} : vector<8x8xf32>, vector<8x8xf32>, vector<8x8xf32> -> vector<8x8xf32>
    %53 = tpu.reciprocal %51 : vector<8x1xf32> -> vector<8x1xf32>
    %54 = vector.broadcast %53 : vector<8x1xf32> to vector<8x8xf32>
    %55 = arith.mulf %52, %54 : vector<8x8xf32>
    %c0_20 = arith.constant 0 : index
    %c16 = arith.constant 16 : index
    %56 = vector.load %arg6[%c0_20, %c16] : memref<8x32xf32, #tpu.memory_space<vmem>>, vector<8x8xf32>
    tpu.vector_store %arg6[%c0_20, %c16], %55 {strides = array<i32>} : memref<8x32xf32, #tpu.memory_space<vmem>>, vector<8x8xf32>,
    %57 = vector.extract_strided_slice %6 {offsets = [0, 24], sizes = [8, 8], strides = [1, 1]} : vector<8x32xf32> to vector<8x8xf32>
    %58 = vector.extract_strided_slice %7 {offsets = [0, 24], sizes = [8, 8], strides = [1, 1]} : vector<8x32xf32> to vector<8x8xf32>
    %59 = vector.extract_strided_slice %8 {offsets = [0, 24], sizes = [8, 8], strides = [1, 1]} : vector<8x32xf32> to vector<8x8xf32>
    %cst_21 = arith.constant dense<0.000000e+00> : vector<8x8xf32>
    %60 = tpu.matmul %57, %58, %cst_21 {dimension_numbers = #tpu.dot_dimension_numbers<[1], [1], [0], [0], [0, 0, 1, 0], [], []>} : vector<8x8xf32>, vector<8x8xf32>, vector<8x8xf32> -> vector<8x8xf32>
    %cst_22 = arith.constant dense<0xFF800000> : vector<8xf32>
    %61 = vector.multi_reduction <maximumf>, %60, %cst_22 [1] : vector<8x8xf32> to vector<8xf32>
    %62 = vector.shape_cast %61 : vector<8xf32> to vector<8x1xf32>
    %63 = vector.broadcast %62 : vector<8x1xf32> to vector<8x8xf32>
    %64 = arith.subf %60, %63 : vector<8x8xf32>
    %65 = math.exp %64 : vector<8x8xf32>
    %cst_23 = arith.constant dense<0.000000e+00> : vector<8xf32>
    %66 = vector.multi_reduction <add>, %65, %cst_23 [1] : vector<8x8xf32> to vector<8xf32>
    %67 = vector.shape_cast %66 : vector<8xf32> to vector<8x1xf32>
    %cst_24 = arith.constant dense<0.000000e+00> : vector<8x8xf32>
    %68 = tpu.matmul %65, %59, %cst_24 {dimension_numbers = #tpu.dot_dimension_numbers<[1], [0], [0], [1], [0, 0, 1, 1], [], []>} : vector<8x8xf32>, vector<8x8xf32>, vector<8x8xf32> -> vector<8x8xf32>
    %69 = tpu.reciprocal %67 : vector<8x1xf32> -> vector<8x1xf32>
    %70 = vector.broadcast %69 : vector<8x1xf32> to vector<8x8xf32>
    %71 = arith.mulf %68, %70 : vector<8x8xf32>
    %c0_25 = arith.constant 0 : index
    %c24 = arith.constant 24 : index
    %72 = vector.load %arg6[%c0_25, %c24] : memref<8x32xf32, #tpu.memory_space<vmem>>, vector<8x8xf32>
    tpu.vector_store %arg6[%c0_25, %c24], %71 {strides = array<i32>} : memref<8x32xf32, #tpu.memory_space<vmem>>, vector<8x8xf32>,
    %c0_26 = arith.constant 0 : index
    %c0_27 = arith.constant 0 : index
    %73 = vector.load %arg6[%c0_26, %c0_27] : memref<8x32xf32, #tpu.memory_space<vmem>>, vector<8x32xf32>
    %c0_28 = arith.constant 0 : index
    %c0_29 = arith.constant 0 : index
    %74 = vector.load %arg3[%c0_28, %c0_29] : memref<32x32xf32, #tpu.memory_space<vmem>>, vector<32x32xf32>
    %cst_30 = arith.constant dense<0.000000e+00> : vector<8x32xf32>
    %75 = tpu.matmul %73, %74, %cst_30 {dimension_numbers = #tpu.dot_dimension_numbers<[1], [0], [0], [1], [0, 0, 1, 1], [], []>} : vector<8x32xf32>, vector<32x32xf32>, vector<8x32xf32> -> vector<8x32xf32>
    %c0_31 = arith.constant 0 : index
    %c0_32 = arith.constant 0 : index
    %76 = vector.load %arg4[%c0_31, %c0_32] : memref<1x32xf32, #tpu.memory_space<vmem>>, vector<1x32xf32>
    %77 = vector.broadcast %76 : vector<1x32xf32> to vector<8x32xf32>
    %78 = arith.addf %75, %77 : vector<8x32xf32>
    %c0_33 = arith.constant 0 : index
    %c0_34 = arith.constant 0 : index
    %c0_35 = arith.constant 0 : index
    %79 = vector.load %arg5[%c0_33, %c0_34, %c0_35] : memref<1x8x32xf32, #tpu.memory_space<vmem>>, vector<1x8x32xf32>
    %80 = vector.shape_cast %79 : vector<1x8x32xf32> to vector<8x32xf32>
    %81 = vector.shape_cast %78 : vector<8x32xf32> to vector<1x8x32xf32>
    tpu.vector_store %arg5[%c0_33, %c0_34, %c0_35], %81 {strides = array<i32>} : memref<1x8x32xf32, #tpu.memory_space<vmem>>, vector<1x8x32xf32>,
    return
  }
  func.func @transform_0(%arg0: i32) -> (i32, i32, i32) {
    %c0_i32 = arith.constant 0 : i32
    %c0_i32_0 = arith.constant 0 : i32
    %c0_i32_1 = arith.constant 0 : i32
    return %arg0, %c0_i32, %c0_i32_0 : i32, i32, i32
  }
  func.func @transform_1(%arg0: i32) -> (i32, i32) {
    %c0_i32 = arith.constant 0 : i32
    %c0_i32_0 = arith.constant 0 : i32
    %c0_i32_1 = arith.constant 0 : i32
    return %c0_i32, %c0_i32_0 : i32, i32
  }
  func.func @transform_2(%arg0: i32) -> (i32, i32) {
    %c0_i32 = arith.constant 0 : i32
    %c0_i32_0 = arith.constant 0 : i32
    %c0_i32_1 = arith.constant 0 : i32
    return %c0_i32, %c0_i32_0 : i32, i32
  }
  func.func @transform_3(%arg0: i32) -> (i32, i32) {
    %c0_i32 = arith.constant 0 : i32
    %c0_i32_0 = arith.constant 0 : i32
    %c0_i32_1 = arith.constant 0 : i32
    return %c0_i32, %c0_i32_0 : i32, i32
  }
  func.func @transform_4(%arg0: i32) -> (i32, i32, i32) {
    %c0_i32 = arith.constant 0 : i32
    %c0_i32_0 = arith.constant 0 : i32
    %c0_i32_1 = arith.constant 0 : i32
    return %arg0, %c0_i32, %c0_i32_0 : i32, i32, i32
  }
}

</mosaic_0001>

<llo_original>
// kernel: tpu_custom_call.1
$region0: #{tpu_custom_call.1}
  #allocation0 [shape = 'u32[]', space=smem, size = 0x4, offset = 0x4, fixed_abs, tag = 'smem constant byte address 0x4 - core index']
  #allocation1 [shape = 'u32[144,128]{1,0:T(1,128)}', space=vmem, size = 0x12000, scoped, tag = 'internal scratch']
  #allocation2 [shape = 'f32[8,32]{1,0:T(8,128)}', space=vmem, size = 0x1000, scoped, tag = 'scratch operand']
  %s0 = inlined_call_operand.hbm [shape: f32[2,8,32], index: 0, kind: input, shape index: {}]
  %s1 = inlined_call_operand.hbm [shape: f32[32,96], index: 1, kind: input, shape index: {}]
  %s2 = inlined_call_operand.hbm [shape: f32[32,32], index: 2, kind: input, shape index: {}]
  %s3 = inlined_call_operand.vmem [shape: f32[1,32], index: 3, kind: input, shape index: {}]
  %s4 = inlined_call_operand.hbm [shape: f32[2,8,32], index: 4, kind: output, shape index: {}]
  %s5 = sld [smem:[#allocation0]]
  $region61: #{tpu_custom_call.1} parent=0
    _
  %s7 = ssub.s32 1, %s5
  %s8 = scalar_select 0, %s7, %s5
  $region1: #{tpu_custom_call.1} parent=0
    #allocation3 [shape = 'u8[8192]{0}', space=vmem, size = 0x2000, scoped, tag = 'input window, operand 0']
    #allocation4 [shape = 's32[2]{0}', space=sflag, size = 0x8, scoped, tag = 'scoped memory for tpu_custom_call.1']
    #allocation5 [shape = 's32[2]{0}', space=sflag, size = 0x8, scoped, tag = 'scoped memory for tpu_custom_call.1']
    #allocation6 [shape = 'u8[16384]{0}', space=vmem, size = 0x4000, scoped, tag = 'input window, operand 1, single buffered']
    #allocation7 [shape = 's32[1]{0}', space=sflag, size = 0x4, scoped, tag = 'scoped memory for tpu_custom_call.1']
    #allocation8 [shape = 'u8[16384]{0}', space=vmem, size = 0x4000, scoped, tag = 'input window, operand 2, single buffered']
    #allocation9 [shape = 'u8[8192]{0}', space=vmem, size = 0x2000, scoped, tag = 'output window, operand 0']
    %9 = vsyncpa [#allocation4], 0
    %s10 = scalar_lea.sflag [#allocation4], 1
    %11 = vsyncpa %s10, 0
    %12 = vsyncpa [#allocation7], 0
    %13 = vsyncpa [#allocation5], 0
    %s14 = scalar_lea.sflag [#allocation5], 1
    %15 = vsyncpa %s14, 0
    loop: start=0, step=1, limit=4
    $region2: #{tpu_custom_call.1} parent=1 // loop_pre_header
      _
    $region3: #{tpu_custom_call.1} parent=1 // loop_header
      %s17 = sphi 0, %s21
      %p18 = scmp.ge.s32.totalorder %s17, 4
      %s27 = sphi 0, %s29
      %s30 = sphi 0, %s27
      %s31 = sphi 0, %s30
      %s47 = sphi 0, %s31
      %s51 = sphi 0, %s51
      %s53 = sphi 0, %s51
      %s54 = sphi 0, %s53
      %s68 = sphi 0, %s54
      %s72 = sphi 0, %s72
      %s74 = sphi 0, %s72
      %s75 = sphi 0, %s74
      %s89 = sphi 0, %s75
      %s93 = sphi 0, %s93
      %s95 = sphi 0, %s93
      %s96 = sphi 0, %s95
      %s110 = sphi 0, %s96
      %s116 = sphi 0, %s118
      %s119 = sphi 0, %s116
      %s120 = sphi 0, %s119
      %s136 = sphi 0, %s120
    $region4: #{tpu_custom_call.1} parent=1 // loop_header_branch
      %20 = sbr.rel (%p18) target = $region8
    $region5: #{tpu_custom_call.1} parent=1 // loop_body
      %s22 = ssub.s32 %s17, 1
      %s23 = ssub.s32 %s17, 2
      %s24 = sadd.s32 %s17, 1
      %s25 = ssub.s32 %s17, %s24
      %p26 = scmp.eq.s32.totalorder %s25, 0
      %s28 = sadd.s32 %s27, 1
      %s29 = scalar_select %p26, %s27, %s28
      %p32 = pneg %p26
      %p33 = scmp.eq.s32.totalorder %s17, 1
      %p34 = por %p32, %p33
      %p35 = scmp.ne.s32.totalorder %s27, %s30
      %p36 = scmp.eq.s32.totalorder %s17, 0
      %p37 = por %p35, %p36
      %p38 = scmp.ne.s32.totalorder %s27, %s30
      %p39 = scmp.eq.s32.totalorder %s22, 1
      %p40 = por %p38, %p39
      %p41 = scmp.ne.s32.totalorder %s30, %s31
      %p42 = scmp.eq.s32.totalorder %s22, 0
      %p43 = por %p41, %p42
      %p44 = scmp.ne.s32.totalorder %s30, %s31
      %p45 = scmp.eq.s32.totalorder %s23, 1
      %p46 = por %p44, %p45
      %p48 = scmp.ne.s32.totalorder %s31, %s47
      %p49 = scmp.eq.s32.totalorder %s23, 0
      %p50 = por %p48, %p49
      %s52 = sadd.s32 %s51, 1
      %p55 = scmp.eq.s32.totalorder %s17, 1
      %p56 = scmp.ne.s32.totalorder %s51, %s53
      %p57 = scmp.eq.s32.totalorder %s17, 0
      %p58 = por %p56, %p57
      %p59 = scmp.ne.s32.totalorder %s51, %s53
      %p60 = scmp.eq.s32.totalorder %s22, 1
      %p61 = por %p59, %p60
      %p62 = scmp.ne.s32.totalorder %s53, %s54
      %p63 = scmp.eq.s32.totalorder %s22, 0
      %p64 = por %p62, %p63
      %p65 = scmp.ne.s32.totalorder %s53, %s54
      %p66 = scmp.eq.s32.totalorder %s23, 1
      %p67 = por %p65, %p66
      %p69 = scmp.ne.s32.totalorder %s54, %s68
      %p70 = scmp.eq.s32.totalorder %s23, 0
      %p71 = por %p69, %p70
      %s73 = sadd.s32 %s72, 1
      %p76 = scmp.eq.s32.totalorder %s17, 1
      %p77 = scmp.ne.s32.totalorder %s72, %s74
      %p78 = scmp.eq.s32.totalorder %s17, 0
      %p79 = por %p77, %p78
      %p80 = scmp.ne.s32.totalorder %s72, %s74
      %p81 = scmp.eq.s32.totalorder %s22, 1
      %p82 = por %p80, %p81
      %p83 = scmp.ne.s32.totalorder %s74, %s75
      %p84 = scmp.eq.s32.totalorder %s22, 0
      %p85 = por %p83, %p84
      %p86 = scmp.ne.s32.totalorder %s74, %s75
      %p87 = scmp.eq.s32.totalorder %s23, 1
      %p88 = por %p86, %p87
      %p90 = scmp.ne.s32.totalorder %s75, %s89
      %p91 = scmp.eq.s32.totalorder %s23, 0
      %p92 = por %p90, %p91
      %s94 = sadd.s32 %s93, 1
      %p97 = scmp.eq.s32.totalorder %s17, 1
      %p98 = scmp.ne.s32.totalorder %s93, %s95
      %p99 = scmp.eq.s32.totalorder %s17, 0
      %p100 = por %p98, %p99
      %p101 = scmp.ne.s32.totalorder %s93, %s95
      %p102 = scmp.eq.s32.totalorder %s22, 1
      %p103 = por %p101, %p102
      %p104 = scmp.ne.s32.totalorder %s95, %s96
      %p105 = scmp.eq.s32.totalorder %s22, 0
      %p106 = por %p104, %p105
      %p107 = scmp.ne.s32.totalorder %s95, %s96
      %p108 = scmp.eq.s32.totalorder %s23, 1
      %p109 = por %p107, %p108
      %p111 = scmp.ne.s32.totalorder %s96, %s110
      %p112 = scmp.eq.s32.totalorder %s23, 0
      %p113 = por %p111, %p112
      %s114 = ssub.s32 %s17, %s24
      %p115 = scmp.eq.s32.totalorder %s114, 0
      %s117 = sadd.s32 %s116, 1
      %s118 = scalar_select %p115, %s116, %s117
      %p121 = pneg %p115
      %p122 = scmp.eq.s32.totalorder %s17, 1
      %p123 = por %p121, %p122
      %p124 = scmp.ne.s32.totalorder %s116, %s119
      %p125 = scmp.eq.s32.totalorder %s17, 0
      %p126 = por %p124, %p125
      %p127 = scmp.ne.s32.totalorder %s116, %s119
      %p128 = scmp.eq.s32.totalorder %s22, 1
      %p129 = por %p127, %p128
      %p130 = scmp.ne.s32.totalorder %s119, %s120
      %p131 = scmp.eq.s32.totalorder %s22, 0
      %p132 = por %p130, %p131
      %p133 = scmp.ne.s32.totalorder %s119, %s120
      %p134 = scmp.eq.s32.totalorder %s23, 1
      %p135 = por %p133, %p134
      %p137 = scmp.ne.s32.totalorder %s120, %s136
      %p138 = scmp.eq.s32.totalorder %s23, 0
      %p139 = por %p137, %p138
      %p140 = scmp.le.s32.totalorder 1, %s17
      %p141 = scmp.lt.s32.totalorder %s17, 3
      %p142 = pnand %p140, %p141
      %p143 = pneg %p142
      // Predicated region
      $region9: #{tpu_custom_call.1} parent=5 // pred_check
        _
      $region10: #{tpu_custom_call.1} parent=5 // pred_check_branch
        %145 = sbr.rel (%p142) target = $region12
      $region11: #{tpu_custom_call.1} parent=5 // pred_region
        %s146 = ssub.s32 %s17, 1
        // Predicated region
        $region13: #{tpu_custom_call.1} parent=11 // pred_check
          %p147 = pneg %p64
        $region14: #{tpu_custom_call.1} parent=11 // pred_check_branch
          %149 = sbr.rel (%p147) target = $region16
        $region15: #{tpu_custom_call.1} parent=11 // pred_region
          %s151 = ssub.s32 512, 512
          %152 = vsyncadd [#allocation7], %s151
          %s153 = sshll.u32 [#allocation6], 4
          %s154 = int_to_ptr.vmem [resolvable:$true] %s153
          %159 = dma.hbm_to_vmem [thread:$0]  %s1, 512, %s154, [#allocation7], 128, 128, 8
        $region16: #{tpu_custom_call.1} parent=11 // pred_fallthru
          _
        // Predicated region
        $region17: #{tpu_custom_call.1} parent=11 // pred_check
          %p160 = pneg %p85
        $region18: #{tpu_custom_call.1} parent=11 // pred_check_branch
          %162 = sbr.rel (%p160) target = $region20
        $region19: #{tpu_custom_call.1} parent=11 // pred_region
          %s164 = ssub.s32 512, 512
          %165 = vsyncadd [#allocation7], %s164
          %s166 = sshll.u32 [#allocation8], 4
          %s167 = int_to_ptr.vmem [resolvable:$true] %s166
          %172 = dma.hbm_to_vmem [thread:$0]  %s2, 512, %s167, [#allocation7], 128, 128, 8
        $region20: #{tpu_custom_call.1} parent=11 // pred_fallthru
          _
        // Predicated region
        $region21: #{tpu_custom_call.1} parent=11 // pred_check
          %p173 = pneg %p106
        $region22: #{tpu_custom_call.1} parent=11 // pred_check_branch
          %175 = sbr.rel (%p173) target = $region24
        $region23: #{tpu_custom_call.1} parent=11 // pred_region
          _
        $region24: #{tpu_custom_call.1} parent=11 // pred_fallthru
          _
      $region12: #{tpu_custom_call.1} parent=5 // pred_fallthru
        _
      %p176 = scmp.lt.s32.totalorder %s17, 2
      // Predicated region
      $region25: #{tpu_custom_call.1} parent=5 // pred_check
        %p177 = pneg %p176
      $region26: #{tpu_custom_call.1} parent=5 // pred_check_branch
        %179 = sbr.rel (%p177) target = $region28
      $region27: #{tpu_custom_call.1} parent=5 // pred_region
        // Predicated region
        $region29: #{tpu_custom_call.1} parent=27 // pred_check
          %p180 = pneg %p37
        $region30: #{tpu_custom_call.1} parent=27 // pred_check_branch
          %182 = sbr.rel (%p180) target = $region32
        $region31: #{tpu_custom_call.1} parent=27 // pred_region
          %s183 = sand.u32 %s27, 1
          %s184 = scalar_lea.sflag [#allocation4], %s183
          %s185 = sand.u32 %s27, 1
          %s186 = smul.addr %s185, 8
          %s187 = scalar_lea.vmem [#allocation3], %s186
          %s189 = ssub.s32 128, 128
          %190 = vsyncadd %s184, %s189
          %s191 = smul.addr %s17, 128
          %s192 = scalar_lea.hbm %s0, %s191
          %s194 = sshll.u32 %s187, 4
          %s195 = int_to_ptr.vmem [resolvable:$true] %s194
          %197 = dma.hbm_to_vmem [thread:$0]  %s192, 128, %s195, %s184
        $region32: #{tpu_custom_call.1} parent=27 // pred_fallthru
          _
      $region28: #{tpu_custom_call.1} parent=5 // pred_fallthru
        _
      %p198 = scmp.le.s32.totalorder 1, %s17
      %p199 = scmp.lt.s32.totalorder %s17, 3
      %p200 = pnand %p198, %p199
      %p201 = pneg %p200
      // Predicated region
      $region33: #{tpu_custom_call.1} parent=5 // pred_check
        _
      $region34: #{tpu_custom_call.1} parent=5 // pred_check_branch
        %203 = sbr.rel (%p200) target = $region36
      $region35: #{tpu_custom_call.1} parent=5 // pred_region
        %s204 = ssub.s32 %s17, 1
        %s205 = sand.u32 %s30, 1
        %s206 = scalar_lea.sflag [#allocation4], %s205
        %s207 = sand.u32 %s30, 1
        %s208 = smul.addr %s207, 8
        %s209 = scalar_lea.vmem [#allocation3], %s208
        // Predicated region
        $region37: #{tpu_custom_call.1} parent=35 // pred_check
          %p210 = pneg %p43
        $region38: #{tpu_custom_call.1} parent=35 // pred_check_branch
          %212 = sbr.rel (%p210) target = $region40
        $region39: #{tpu_custom_call.1} parent=35 // pred_region
          %213 = dma.done %s206, 128
        $region40: #{tpu_custom_call.1} parent=35 // pred_fallthru
          _
        // Predicated region
        $region41: #{tpu_custom_call.1} parent=35 // pred_check
          %p214 = pneg %p64
        $region42: #{tpu_custom_call.1} parent=35 // pred_check_branch
          %216 = sbr.rel (%p214) target = $region44
        $region43: #{tpu_custom_call.1} parent=35 // pred_region
          %217 = dma.done [#allocation7], 512
        $region44: #{tpu_custom_call.1} parent=35 // pred_fallthru
          _
        // Predicated region
        $region45: #{tpu_custom_call.1} parent=35 // pred_check
          %p218 = pneg %p85
        $region46: #{tpu_custom_call.1} parent=35 // pred_check_branch
          %220 = sbr.rel (%p218) target = $region48
        $region47: #{tpu_custom_call.1} parent=35 // pred_region
          %221 = dma.done [#allocation7], 512
        $region48: #{tpu_custom_call.1} parent=35 // pred_fallthru
          _
        %s222 = sand.u32 %s30, 1
        %s223 = scalar_lea.sflag [#allocation4], %s222
        %s224 = sand.u32 %s30, 1
        %s225 = smul.addr %s224, 8
        %s226 = scalar_lea.vmem [#allocation3], %s225
        %p227 = pneg %p43
        %p228 = pneg %p40
        %p229 = pneg %p64
        %p230 = pneg %p61
        %p231 = pneg %p85
        %p232 = pneg %p82
        %p233 = pneg %p106
        %p234 = pneg %p103
        %p235 = pneg %p132
        %p236 = pneg %p129
        %s237 = sand.u32 %s119, 1
        %s238 = scalar_lea.sflag [#allocation5], %s237
        %s239 = sand.u32 %s119, 1
        %s240 = smul.addr %s239, 8
        %s241 = scalar_lea.vmem [#allocation9], %s240
        %v242 = vld [vmem:[%s209] sm:$0xff]
        %v243 = vld [vmem:[#allocation6] sm:$0xff]
        %v244 = vld [vmem:[#allocation6 + $0x8] sm:$0xff]
        %v245 = vld [vmem:[#allocation6 + $0x10] sm:$0xff]
        %v246 = vld [vmem:[#allocation6 + $0x18] sm:$0xff]
        %vm247 = vcmask 261120
        %v249 = vsel %vm247, %v242, 0
        %251 = vmatprep.subr.mxu0 0.0
        %252 = vmatpush1.msra.mxu0 0.0
        %253 = vmatprep.subr.mxu0 0.0
        %254 = vmatpush1.msra.mxu0 0.0
        %255 = vmatprep.subr.mxu0 0.0
        %256 = vmatpush1.msra.mxu0 0.0
        %257 = vmatprep.subr.mxu0 0.0
        %258 = vmatpush1.msra.mxu0 0.0
        %259 = vmatprep.subr.mxu0 0.0
        %260 = vmatpush1.msra.mxu0 0.0
        %261 = vmatprep.subr.mxu0 0.0
        %262 = vmatpush1.msra.mxu0 0.0
        %263 = vmatprep.subr.mxu0 0.0
        %264 = vmatpush1.msra.mxu0 0.0
        %265 = vmatprep.subr.mxu0 0.0
        %266 = vmatpush1.msra.mxu0 0.0
        %267 = vmatprep.subr.mxu0 0.0
        %268 = vmatpush1.msra.mxu0 0.0
        %269 = vmatprep.subr.mxu0 0.0
        %270 = vmatpush1.msra.mxu0 0.0
        %271 = vmatprep.subr.mxu0 0.0
        %272 = vmatpush1.msra.mxu0 0.0
        %273 = vmatprep.subr.mxu0 0.0
        %274 = vmatpush1.msra.mxu0 0.0
        %275 = vmatprep.subr.mxu0 0.0
        %276 = vmatpush1.msra.mxu0 %v246
        %277 = vmatprep.subr.mxu0 0.0
        %278 = vmatpush1.msra.mxu0 %v245
        %279 = vmatprep.subr.mxu0 0.0
        %280 = vmatpush1.msra.mxu0 %v244
        %281 = vmatprep.subr.mxu0 0.0
        %282 = vmatpush1.msra.mxu0 %v243
        %283 = vmatprep.subr.mxu0 0.0
        %284 = vmatpush2.msra.mxu0 0.0
        %285 = vmatprep.subr.mxu0 0.0
        %286 = vmatpush2.msra.mxu0 0.0
        %287 = vmatprep.subr.mxu0 0.0
        %288 = vmatpush2.msra.mxu0 0.0
        %289 = vmatprep.subr.mxu0 0.0
        %290 = vmatpush2.msra.mxu0 0.0
        %291 = vmatprep.subr.mxu0 0.0
        %292 = vmatpush2.msra.mxu0 0.0
        %293 = vmatprep.subr.mxu0 0.0
        %294 = vmatpush2.msra.mxu0 0.0
        %295 = vmatprep.subr.mxu0 0.0
        %296 = vmatpush2.msra.mxu0 0.0
        %297 = vmatprep.subr.mxu0 0.0
        %298 = vmatpush2.msra.mxu0 0.0
        %299 = vmatprep.subr.mxu0 0.0
        %300 = vmatpush2.msra.mxu0 0.0
        %301 = vmatprep.subr.mxu0 0.0
        %302 = vmatpush2.msra.mxu0 0.0
        %303 = vmatprep.subr.mxu0 0.0
        %304 = vmatpush2.msra.mxu0 0.0
        %305 = vmatprep.subr.mxu0 0.0
        %306 = vmatpush2.msra.mxu0 0.0
        %307 = vmatprep.subr.mxu0 0.0
        %308 = vmatpush2.msra.mxu0 0.0
        %309 = vmatprep.subr.mxu0 0.0
        %310 = vmatpush2.msra.mxu0 0.0
        %311 = vmatprep.subr.mxu0 0.0
        %312 = vmatpush2.msra.mxu0 0.0
        %313 = vmatprep.subr.mxu0 0.0
        %314 = vmatpush2.msra.mxu0 0.0
        %315 = vmatprep.mubr.f32.mxu0 0.0
        %316 = vmatmul.mubr.f32.gmra.mxu0 %v249
        %v317 = vpop.f32.mrf.mxu0
        %v318 = vadd.f32 0.0, %v317
        %v319 = vpop.f32.mrf.mxu0
        %320 = vdwg.mxu0
        %v321 = vmul.f32 %v318, 0.35355338
        %323 = vrot.lane.b32.xlu0 %v318, 96
        %v324 = vpop.permute.xlu0 %323
        %vm325 = vcmask 64512
        %v327 = vsel %vm325, %v321, 0
        %v329 = vsel %vm325, %v324, 0
        %331 = vmatprep.subr.mxu0 0.0
        %332 = vmatpush1.xpose.msra.mxu0 0.0
        %333 = vmatprep.subr.mxu0 0.0
        %334 = vmatpush1.xpose.msra.mxu0 0.0
        %335 = vmatprep.subr.mxu0 0.0
        %336 = vmatpush1.xpose.msra.mxu0 0.0
        %337 = vmatprep.subr.mxu0 0.0
        %338 = vmatpush1.xpose.msra.mxu0 0.0
        %339 = vmatprep.subr.mxu0 0.0
        %340 = vmatpush1.xpose.msra.mxu0 0.0
        %341 = vmatprep.subr.mxu0 0.0
        %342 = vmatpush1.xpose.msra.mxu0 0.0
        %343 = vmatprep.subr.mxu0 0.0
        %344 = vmatpush1.xpose.msra.mxu0 0.0
        %345 = vmatprep.subr.mxu0 0.0
        %346 = vmatpush1.xpose.msra.mxu0 0.0
        %347 = vmatprep.subr.mxu0 0.0
        %348 = vmatpush1.xpose.msra.mxu0 0.0
        %349 = vmatprep.subr.mxu0 0.0
        %350 = vmatpush1.xpose.msra.mxu0 0.0
        %351 = vmatprep.subr.mxu0 0.0
        %352 = vmatpush1.xpose.msra.mxu0 0.0
        %353 = vmatprep.subr.mxu0 0.0
        %354 = vmatpush1.xpose.msra.mxu0 0.0
        %355 = vmatprep.subr.mxu0 0.0
        %356 = vmatpush1.xpose.msra.mxu0 0.0
        %357 = vmatprep.subr.mxu0 0.0
        %358 = vmatpush1.xpose.msra.mxu0 0.0
        %359 = vmatprep.subr.mxu0 0.0
        %360 = vmatpush1.xpose.msra.mxu0 0.0
        %361 = vmatprep.subr.mxu0 0.0
        %362 = vmatpush1.xpose.msra.mxu0 %v329
        %363 = vmatprep.subr.mxu0 0.0
        %364 = vmatpush2.xpose.msra.mxu0 0.0
        %365 = vmatprep.subr.mxu0 0.0
        %366 = vmatpush2.xpose.msra.mxu0 0.0
        %367 = vmatprep.subr.mxu0 0.0
        %368 = vmatpush2.xpose.msra.mxu0 0.0
        %369 = vmatprep.subr.mxu0 0.0
        %370 = vmatpush2.xpose.msra.mxu0 0.0
        %371 = vmatprep.subr.mxu0 0.0
        %372 = vmatpush2.xpose.msra.mxu0 0.0
        %373 = vmatprep.subr.mxu0 0.0
        %374 = vmatpush2.xpose.msra.mxu0 0.0
        %375 = vmatprep.subr.mxu0 0.0
        %376 = vmatpush2.xpose.msra.mxu0 0.0
        %377 = vmatprep.subr.mxu0 0.0
        %378 = vmatpush2.xpose.msra.mxu0 0.0
        %379 = vmatprep.subr.mxu0 0.0
        %380 = vmatpush2.xpose.msra.mxu0 0.0
        %381 = vmatprep.subr.mxu0 0.0
        %382 = vmatpush2.xpose.msra.mxu0 0.0
        %383 = vmatprep.subr.mxu0 0.0
        %384 = vmatpush2.xpose.msra.mxu0 0.0
        %385 = vmatprep.subr.mxu0 0.0
        %386 = vmatpush2.xpose.msra.mxu0 0.0
        %387 = vmatprep.subr.mxu0 0.0
        %388 = vmatpush2.xpose.msra.mxu0 0.0
        %389 = vmatprep.subr.mxu0 0.0
        %390 = vmatpush2.xpose.msra.mxu0 0.0
        %391 = vmatprep.subr.mxu0 0.0
        %392 = vmatpush2.xpose.msra.mxu0 0.0
        %393 = vmatprep.subr.mxu0 0.0
        %394 = vmatpush2.xpose.msra.mxu0 0.0
        %395 = vmatprep.mubr.f32.mxu0 0.0
        %396 = vmatmul.mubr.f32.gmra.mxu0 %v327
        %v397 = vpop.f32.mrf.mxu0
        %v398 = vadd.f32 0.0, %v397
        %v399 = vpop.f32.mrf.mxu0
        %400 = vdwg.mxu0
        %v401 = vsel %vm325, %v398, -inf
        %402 = vmax.xlane.f32.xlu0 %v401
        %v403 = vpop.xlane.xlu0 %402
        %v404 = vsub.f32 %v398, %v403
        %v405 = vmul.f32 %v404, 1.442695
        %v406 = vpow.pop %v405
        %v407 = vsel %vm325, %v406, 0.0
        %408 = vadd.xlane.f32.xlu0 %v407
        %v409 = vpop.xlane.xlu0 %408
        %410 = vrot.lane.b32.xlu0 %v318, 64
        %v411 = vpop.permute.xlu0 %410
        %v414 = vsel %vm325, %v406, 0
        %416 = vmatprep.subr.mxu0 0.0
        %417 = vmatpush1.msra.mxu0 0.0
        %418 = vmatprep.subr.mxu0 0.0
        %419 = vmatpush1.msra.mxu0 0.0
        %420 = vmatprep.subr.mxu0 0.0
        %421 = vmatpush1.msra.mxu0 0.0
        %422 = vmatprep.subr.mxu0 0.0
        %423 = vmatpush1.msra.mxu0 0.0
        %424 = vmatprep.subr.mxu0 0.0
        %425 = vmatpush1.msra.mxu0 0.0
        %426 = vmatprep.subr.mxu0 0.0
        %427 = vmatpush1.msra.mxu0 0.0
        %428 = vmatprep.subr.mxu0 0.0
        %429 = vmatpush1.msra.mxu0 0.0
        %430 = vmatprep.subr.mxu0 0.0
        %431 = vmatpush1.msra.mxu0 0.0
        %432 = vmatprep.subr.mxu0 0.0
        %433 = vmatpush1.msra.mxu0 0.0
        %434 = vmatprep.subr.mxu0 0.0
        %435 = vmatpush1.msra.mxu0 0.0
        %436 = vmatprep.subr.mxu0 0.0
        %437 = vmatpush1.msra.mxu0 0.0
        %438 = vmatprep.subr.mxu0 0.0
        %439 = vmatpush1.msra.mxu0 0.0
        %440 = vmatprep.subr.mxu0 0.0
        %441 = vmatpush1.msra.mxu0 0.0
        %442 = vmatprep.subr.mxu0 0.0
        %443 = vmatpush1.msra.mxu0 0.0
        %444 = vmatprep.subr.mxu0 0.0
        %445 = vmatpush1.msra.mxu0 0.0
        %446 = vmatprep.subr.mxu0 0.0
        %447 = vmatpush1.msra.mxu0 %v411
        %448 = vmatprep.subr.mxu0 0.0
        %449 = vmatpush2.msra.mxu0 0.0
        %450 = vmatprep.subr.mxu0 0.0
        %451 = vmatpush2.msra.mxu0 0.0
        %452 = vmatprep.subr.mxu0 0.0
        %453 = vmatpush2.msra.mxu0 0.0
        %454 = vmatprep.subr.mxu0 0.0
        %455 = vmatpush2.msra.mxu0 0.0
        %456 = vmatprep.subr.mxu0 0.0
        %457 = vmatpush2.msra.mxu0 0.0
        %458 = vmatprep.subr.mxu0 0.0
        %459 = vmatpush2.msra.mxu0 0.0
        %460 = vmatprep.subr.mxu0 0.0
        %461 = vmatpush2.msra.mxu0 0.0
        %462 = vmatprep.subr.mxu0 0.0
        %463 = vmatpush2.msra.mxu0 0.0
        %464 = vmatprep.subr.mxu0 0.0
        %465 = vmatpush2.msra.mxu0 0.0
        %466 = vmatprep.subr.mxu0 0.0
        %467 = vmatpush2.msra.mxu0 0.0
        %468 = vmatprep.subr.mxu0 0.0
        %469 = vmatpush2.msra.mxu0 0.0
        %470 = vmatprep.subr.mxu0 0.0
        %471 = vmatpush2.msra.mxu0 0.0
        %472 = vmatprep.subr.mxu0 0.0
        %473 = vmatpush2.msra.mxu0 0.0
        %474 = vmatprep.subr.mxu0 0.0
        %475 = vmatpush2.msra.mxu0 0.0
        %476 = vmatprep.subr.mxu0 0.0
        %477 = vmatpush2.msra.mxu0 0.0
        %478 = vmatprep.subr.mxu0 0.0
        %479 = vmatpush2.msra.mxu0 0.0
        %480 = vmatprep.mubr.f32.mxu0 0.0
        %481 = vmatmul.mubr.f32.gmra.mxu0 %v414
        %v482 = vpop.f32.mrf.mxu0
        %v483 = vadd.f32 0.0, %v482
        %v484 = vpop.f32.mrf.mxu0
        %485 = vdwg.mxu0
        %v486 = vrcp.pop %v409
        %v487 = vmul.f32 %v483, %v486
        %488 = vst.msk [vmem:[#allocation2] sm:$0xff] %vm325, %v487
        %489 = vrot.lane.b32.xlu0 %v321, 120
        %v490 = vpop.permute.xlu0 %489
        %491 = vrot.lane.b32.xlu0 %v318, 88
        %v492 = vpop.permute.xlu0 %491
        %v493 = vsel %vm325, %v490, 0
        %v495 = vsel %vm325, %v492, 0
        %497 = vmatprep.subr.mxu0 0.0
        %498 = vmatpush1.xpose.msra.mxu0 0.0
        %499 = vmatprep.subr.mxu0 0.0
        %500 = vmatpush1.xpose.msra.mxu0 0.0
        %501 = vmatprep.subr.mxu0 0.0
        %502 = vmatpush1.xpose.msra.mxu0 0.0
        %503 = vmatprep.subr.mxu0 0.0
        %504 = vmatpush1.xpose.msra.mxu0 0.0
        %505 = vmatprep.subr.mxu0 0.0
        %506 = vmatpush1.xpose.msra.mxu0 0.0
        %507 = vmatprep.subr.mxu0 0.0
        %508 = vmatpush1.xpose.msra.mxu0 0.0
        %509 = vmatprep.subr.mxu0 0.0
        %510 = vmatpush1.xpose.msra.mxu0 0.0
        %511 = vmatprep.subr.mxu0 0.0
        %512 = vmatpush1.xpose.msra.mxu0 0.0
        %513 = vmatprep.subr.mxu0 0.0
        %514 = vmatpush1.xpose.msra.mxu0 0.0
        %515 = vmatprep.subr.mxu0 0.0
        %516 = vmatpush1.xpose.msra.mxu0 0.0
        %517 = vmatprep.subr.mxu0 0.0
        %518 = vmatpush1.xpose.msra.mxu0 0.0
        %519 = vmatprep.subr.mxu0 0.0
        %520 = vmatpush1.xpose.msra.mxu0 0.0
        %521 = vmatprep.subr.mxu0 0.0
        %522 = vmatpush1.xpose.msra.mxu0 0.0
        %523 = vmatprep.subr.mxu0 0.0
        %524 = vmatpush1.xpose.msra.mxu0 0.0
        %525 = vmatprep.subr.mxu0 0.0
        %526 = vmatpush1.xpose.msra.mxu0 0.0
        %527 = vmatprep.subr.mxu0 0.0
        %528 = vmatpush1.xpose.msra.mxu0 %v495
        %529 = vmatprep.subr.mxu0 0.0
        %530 = vmatpush2.xpose.msra.mxu0 0.0
        %531 = vmatprep.subr.mxu0 0.0
        %532 = vmatpush2.xpose.msra.mxu0 0.0
        %533 = vmatprep.subr.mxu0 0.0
        %534 = vmatpush2.xpose.msra.mxu0 0.0
        %535 = vmatprep.subr.mxu0 0.0
        %536 = vmatpush2.xpose.msra.mxu0 0.0
        %537 = vmatprep.subr.mxu0 0.0
        %538 = vmatpush2.xpose.msra.mxu0 0.0
        %539 = vmatprep.subr.mxu0 0.0
        %540 = vmatpush2.xpose.msra.mxu0 0.0
        %541 = vmatprep.subr.mxu0 0.0
        %542 = vmatpush2.xpose.msra.mxu0 0.0
        %543 = vmatprep.subr.mxu0 0.0
        %544 = vmatpush2.xpose.msra.mxu0 0.0
        %545 = vmatprep.subr.mxu0 0.0
        %546 = vmatpush2.xpose.msra.mxu0 0.0
        %547 = vmatprep.subr.mxu0 0.0
        %548 = vmatpush2.xpose.msra.mxu0 0.0
        %549 = vmatprep.subr.mxu0 0.0
        %550 = vmatpush2.xpose.msra.mxu0 0.0
        %551 = vmatprep.subr.mxu0 0.0
        %552 = vmatpush2.xpose.msra.mxu0 0.0
        %553 = vmatprep.subr.mxu0 0.0
        %554 = vmatpush2.xpose.msra.mxu0 0.0
        %555 = vmatprep.subr.mxu0 0.0
        %556 = vmatpush2.xpose.msra.mxu0 0.0
        %557 = vmatprep.subr.mxu0 0.0
        %558 = vmatpush2.xpose.msra.mxu0 0.0
        %559 = vmatprep.subr.mxu0 0.0
        %560 = vmatpush2.xpose.msra.mxu0 0.0
        %561 = vmatprep.mubr.f32.mxu0 0.0
        %562 = vmatmul.mubr.f32.gmra.mxu0 %v493
        %v563 = vpop.f32.mrf.mxu0
        %v564 = vadd.f32 0.0, %v563
        %v565 = vpop.f32.mrf.mxu0
        %566 = vdwg.mxu0
        %v567 = vsel %vm325, %v564, -inf
        %568 = vmax.xlane.f32.xlu0 %v567
        %v569 = vpop.xlane.xlu0 %568
        %v570 = vsub.f32 %v564, %v569
        %v571 = vmul.f32 %v570, 1.442695
        %v572 = vpow.pop %v571
        %v573 = vsel %vm325, %v572, 0.0
        %574 = vadd.xlane.f32.xlu0 %v573
        %v575 = vpop.xlane.xlu0 %574
        %576 = vrot.lane.b32.xlu0 %v318, 56
        %v577 = vpop.permute.xlu0 %576
        %v580 = vsel %vm325, %v572, 0
        %582 = vmatprep.subr.mxu0 0.0
        %583 = vmatpush1.msra.mxu0 0.0
        %584 = vmatprep.subr.mxu0 0.0
        %585 = vmatpush1.msra.mxu0 0.0
        %586 = vmatprep.subr.mxu0 0.0
        %587 = vmatpush1.msra.mxu0 0.0
        %588 = vmatprep.subr.mxu0 0.0
        %589 = vmatpush1.msra.mxu0 0.0
        %590 = vmatprep.subr.mxu0 0.0
        %591 = vmatpush1.msra.mxu0 0.0
        %592 = vmatprep.subr.mxu0 0.0
        %593 = vmatpush1.msra.mxu0 0.0
        %594 = vmatprep.subr.mxu0 0.0
        %595 = vmatpush1.msra.mxu0 0.0
        %596 = vmatprep.subr.mxu0 0.0
        %597 = vmatpush1.msra.mxu0 0.0
        %598 = vmatprep.subr.mxu0 0.0
        %599 = vmatpush1.msra.mxu0 0.0
        %600 = vmatprep.subr.mxu0 0.0
        %601 = vmatpush1.msra.mxu0 0.0
        %602 = vmatprep.subr.mxu0 0.0
        %603 = vmatpush1.msra.mxu0 0.0
        %604 = vmatprep.subr.mxu0 0.0
        %605 = vmatpush1.msra.mxu0 0.0
        %606 = vmatprep.subr.mxu0 0.0
        %607 = vmatpush1.msra.mxu0 0.0
        %608 = vmatprep.subr.mxu0 0.0
        %609 = vmatpush1.msra.mxu0 0.0
        %610 = vmatprep.subr.mxu0 0.0
        %611 = vmatpush1.msra.mxu0 0.0
        %612 = vmatprep.subr.mxu0 0.0
        %613 = vmatpush1.msra.mxu0 %v577
        %614 = vmatprep.subr.mxu0 0.0
        %615 = vmatpush2.msra.mxu0 0.0
        %616 = vmatprep.subr.mxu0 0.0
        %617 = vmatpush2.msra.mxu0 0.0
        %618 = vmatprep.subr.mxu0 0.0
        %619 = vmatpush2.msra.mxu0 0.0
        %620 = vmatprep.subr.mxu0 0.0
        %621 = vmatpush2.msra.mxu0 0.0
        %622 = vmatprep.subr.mxu0 0.0
        %623 = vmatpush2.msra.mxu0 0.0
        %624 = vmatprep.subr.mxu0 0.0
        %625 = vmatpush2.msra.mxu0 0.0
        %626 = vmatprep.subr.mxu0 0.0
        %627 = vmatpush2.msra.mxu0 0.0
        %628 = vmatprep.subr.mxu0 0.0
        %629 = vmatpush2.msra.mxu0 0.0
        %630 = vmatprep.subr.mxu0 0.0
        %631 = vmatpush2.msra.mxu0 0.0
        %632 = vmatprep.subr.mxu0 0.0
        %633 = vmatpush2.msra.mxu0 0.0
        %634 = vmatprep.subr.mxu0 0.0
        %635 = vmatpush2.msra.mxu0 0.0
        %636 = vmatprep.subr.mxu0 0.0
        %637 = vmatpush2.msra.mxu0 0.0
        %638 = vmatprep.subr.mxu0 0.0
        %639 = vmatpush2.msra.mxu0 0.0
        %640 = vmatprep.subr.mxu0 0.0
        %641 = vmatpush2.msra.mxu0 0.0
        %642 = vmatprep.subr.mxu0 0.0
        %643 = vmatpush2.msra.mxu0 0.0
        %644 = vmatprep.subr.mxu0 0.0
        %645 = vmatpush2.msra.mxu0 0.0
        %646 = vmatprep.mubr.f32.mxu0 0.0
        %647 = vmatmul.mubr.f32.gmra.mxu0 %v580
        %v648 = vpop.f32.mrf.mxu0
        %v649 = vadd.f32 0.0, %v648
        %v650 = vpop.f32.mrf.mxu0
        %651 = vdwg.mxu0
        %v652 = vrcp.pop %v575
        %v653 = vmul.f32 %v649, %v652
        %655 = vrot.lane.b32.xlu0 %v653, 8
        %v656 = vpop.permute.xlu0 %655
        %vm658 = vcmask 130112
        %659 = vst.msk [vmem:[#allocation2] sm:$0xff] %vm658, %v656
        %660 = vrot.lane.b32.xlu0 %v321, 112
        %v661 = vpop.permute.xlu0 %660
        %662 = vrot.lane.b32.xlu0 %v318, 80
        %v663 = vpop.permute.xlu0 %662
        %v664 = vsel %vm325, %v661, 0
        %v666 = vsel %vm325, %v663, 0
        %668 = vmatprep.subr.mxu0 0.0
        %669 = vmatpush1.xpose.msra.mxu0 0.0
        %670 = vmatprep.subr.mxu0 0.0
        %671 = vmatpush1.xpose.msra.mxu0 0.0
        %672 = vmatprep.subr.mxu0 0.0
        %673 = vmatpush1.xpose.msra.mxu0 0.0
        %674 = vmatprep.subr.mxu0 0.0
        %675 = vmatpush1.xpose.msra.mxu0 0.0
        %676 = vmatprep.subr.mxu0 0.0
        %677 = vmatpush1.xpose.msra.mxu0 0.0
        %678 = vmatprep.subr.mxu0 0.0
        %679 = vmatpush1.xpose.msra.mxu0 0.0
        %680 = vmatprep.subr.mxu0 0.0
        %681 = vmatpush1.xpose.msra.mxu0 0.0
        %682 = vmatprep.subr.mxu0 0.0
        %683 = vmatpush1.xpose.msra.mxu0 0.0
        %684 = vmatprep.subr.mxu0 0.0
        %685 = vmatpush1.xpose.msra.mxu0 0.0
        %686 = vmatprep.subr.mxu0 0.0
        %687 = vmatpush1.xpose.msra.mxu0 0.0
        %688 = vmatprep.subr.mxu0 0.0
        %689 = vmatpush1.xpose.msra.mxu0 0.0
        %690 = vmatprep.subr.mxu0 0.0
        %691 = vmatpush1.xpose.msra.mxu0 0.0
        %692 = vmatprep.subr.mxu0 0.0
        %693 = vmatpush1.xpose.msra.mxu0 0.0
        %694 = vmatprep.subr.mxu0 0.0
        %695 = vmatpush1.xpose.msra.mxu0 0.0
        %696 = vmatprep.subr.mxu0 0.0
        %697 = vmatpush1.xpose.msra.mxu0 0.0
        %698 = vmatprep.subr.mxu0 0.0
        %699 = vmatpush1.xpose.msra.mxu0 %v666
        %700 = vmatprep.subr.mxu0 0.0
        %701 = vmatpush2.xpose.msra.mxu0 0.0
        %702 = vmatprep.subr.mxu0 0.0
        %703 = vmatpush2.xpose.msra.mxu0 0.0
        %704 = vmatprep.subr.mxu0 0.0
        %705 = vmatpush2.xpose.msra.mxu0 0.0
        %706 = vmatprep.subr.mxu0 0.0
        %707 = vmatpush2.xpose.msra.mxu0 0.0
        %708 = vmatprep.subr.mxu0 0.0
        %709 = vmatpush2.xpose.msra.mxu0 0.0
        %710 = vmatprep.subr.mxu0 0.0
        %711 = vmatpush2.xpose.msra.mxu0 0.0
        %712 = vmatprep.subr.mxu0 0.0
        %713 = vmatpush2.xpose.msra.mxu0 0.0
        %714 = vmatprep.subr.mxu0 0.0
        %715 = vmatpush2.xpose.msra.mxu0 0.0
        %716 = vmatprep.subr.mxu0 0.0
        %717 = vmatpush2.xpose.msra.mxu0 0.0
        %718 = vmatprep.subr.mxu0 0.0
        %719 = vmatpush2.xpose.msra.mxu0 0.0
        %720 = vmatprep.subr.mxu0 0.0
        %721 = vmatpush2.xpose.msra.mxu0 0.0
        %722 = vmatprep.subr.mxu0 0.0
        %723 = vmatpush2.xpose.msra.mxu0 0.0
        %724 = vmatprep.subr.mxu0 0.0
        %725 = vmatpush2.xpose.msra.mxu0 0.0
        %726 = vmatprep.subr.mxu0 0.0
        %727 = vmatpush2.xpose.msra.mxu0 0.0
        %728 = vmatprep.subr.mxu0 0.0
        %729 = vmatpush2.xpose.msra.mxu0 0.0
        %730 = vmatprep.subr.mxu0 0.0
        %731 = vmatpush2.xpose.msra.mxu0 0.0
        %732 = vmatprep.mubr.f32.mxu0 0.0
        %733 = vmatmul.mubr.f32.gmra.mxu0 %v664
        %v734 = vpop.f32.mrf.mxu0
        %v735 = vadd.f32 0.0, %v734
        %v736 = vpop.f32.mrf.mxu0
        %737 = vdwg.mxu0
        %v738 = vsel %vm325, %v735, -inf
        %739 = vmax.xlane.f32.xlu0 %v738
        %v740 = vpop.xlane.xlu0 %739
        %v741 = vsub.f32 %v735, %v740
        %v742 = vmul.f32 %v741, 1.442695
        %v743 = vpow.pop %v742
        %v744 = vsel %vm325, %v743, 0.0
        %745 = vadd.xlane.f32.xlu0 %v744
        %v746 = vpop.xlane.xlu0 %745
        %747 = vrot.lane.b32.xlu0 %v318, 48
        %v748 = vpop.permute.xlu0 %747
        %v751 = vsel %vm325, %v743, 0
        %753 = vmatprep.subr.mxu0 0.0
        %754 = vmatpush1.msra.mxu0 0.0
        %755 = vmatprep.subr.mxu0 0.0
        %756 = vmatpush1.msra.mxu0 0.0
        %757 = vmatprep.subr.mxu0 0.0
        %758 = vmatpush1.msra.mxu0 0.0
        %759 = vmatprep.subr.mxu0 0.0
        %760 = vmatpush1.msra.mxu0 0.0
        %761 = vmatprep.subr.mxu0 0.0
        %762 = vmatpush1.msra.mxu0 0.0
        %763 = vmatprep.subr.mxu0 0.0
        %764 = vmatpush1.msra.mxu0 0.0
        %765 = vmatprep.subr.mxu0 0.0
        %766 = vmatpush1.msra.mxu0 0.0
        %767 = vmatprep.subr.mxu0 0.0
        %768 = vmatpush1.msra.mxu0 0.0
        %769 = vmatprep.subr.mxu0 0.0
        %770 = vmatpush1.msra.mxu0 0.0
        %771 = vmatprep.subr.mxu0 0.0
        %772 = vmatpush1.msra.mxu0 0.0
        %773 = vmatprep.subr.mxu0 0.0
        %774 = vmatpush1.msra.mxu0 0.0
        %775 = vmatprep.subr.mxu0 0.0
        %776 = vmatpush1.msra.mxu0 0.0
        %777 = vmatprep.subr.mxu0 0.0
        %778 = vmatpush1.msra.mxu0 0.0
        %779 = vmatprep.subr.mxu0 0.0
        %780 = vmatpush1.msra.mxu0 0.0
        %781 = vmatprep.subr.mxu0 0.0
        %782 = vmatpush1.msra.mxu0 0.0
        %783 = vmatprep.subr.mxu0 0.0
        %784 = vmatpush1.msra.mxu0 %v748
        %785 = vmatprep.subr.mxu0 0.0
        %786 = vmatpush2.msra.mxu0 0.0
        %787 = vmatprep.subr.mxu0 0.0
        %788 = vmatpush2.msra.mxu0 0.0
        %789 = vmatprep.subr.mxu0 0.0
        %790 = vmatpush2.msra.mxu0 0.0
        %791 = vmatprep.subr.mxu0 0.0
        %792 = vmatpush2.msra.mxu0 0.0
        %793 = vmatprep.subr.mxu0 0.0
        %794 = vmatpush2.msra.mxu0 0.0
        %795 = vmatprep.subr.mxu0 0.0
        %796 = vmatpush2.msra.mxu0 0.0
        %797 = vmatprep.subr.mxu0 0.0
        %798 = vmatpush2.msra.mxu0 0.0
        %799 = vmatprep.subr.mxu0 0.0
        %800 = vmatpush2.msra.mxu0 0.0
        %801 = vmatprep.subr.mxu0 0.0
        %802 = vmatpush2.msra.mxu0 0.0
        %803 = vmatprep.subr.mxu0 0.0
        %804 = vmatpush2.msra.mxu0 0.0
        %805 = vmatprep.subr.mxu0 0.0
        %806 = vmatpush2.msra.mxu0 0.0
        %807 = vmatprep.subr.mxu0 0.0
        %808 = vmatpush2.msra.mxu0 0.0
        %809 = vmatprep.subr.mxu0 0.0
        %810 = vmatpush2.msra.mxu0 0.0
        %811 = vmatprep.subr.mxu0 0.0
        %812 = vmatpush2.msra.mxu0 0.0
        %813 = vmatprep.subr.mxu0 0.0
        %814 = vmatpush2.msra.mxu0 0.0
        %815 = vmatprep.subr.mxu0 0.0
        %816 = vmatpush2.msra.mxu0 0.0
        %817 = vmatprep.mubr.f32.mxu0 0.0
        %818 = vmatmul.mubr.f32.gmra.mxu0 %v751
        %v819 = vpop.f32.mrf.mxu0
        %v820 = vadd.f32 0.0, %v819
        %v821 = vpop.f32.mrf.mxu0
        %822 = vdwg.mxu0
        %v823 = vrcp.pop %v746
        %v824 = vmul.f32 %v820, %v823
        %826 = vrot.lane.b32.xlu0 %v824, 16
        %v827 = vpop.permute.xlu0 %826
        %vm829 = vcmask 195712
        %830 = vst.msk [vmem:[#allocation2] sm:$0xff] %vm829, %v827
        %831 = vrot.lane.b32.xlu0 %v321, 104
        %v832 = vpop.permute.xlu0 %831
        %833 = vrot.lane.b32.xlu0 %v318, 72
        %v834 = vpop.permute.xlu0 %833
        %v835 = vsel %vm325, %v832, 0
        %v837 = vsel %vm325, %v834, 0
        %839 = vmatprep.subr.mxu0 0.0
        %840 = vmatpush1.xpose.msra.mxu0 0.0
        %841 = vmatprep.subr.mxu0 0.0
        %842 = vmatpush1.xpose.msra.mxu0 0.0
        %843 = vmatprep.subr.mxu0 0.0
        %844 = vmatpush1.xpose.msra.mxu0 0.0
        %845 = vmatprep.subr.mxu0 0.0
        %846 = vmatpush1.xpose.msra.mxu0 0.0
        %847 = vmatprep.subr.mxu0 0.0
        %848 = vmatpush1.xpose.msra.mxu0 0.0
        %849 = vmatprep.subr.mxu0 0.0
        %850 = vmatpush1.xpose.msra.mxu0 0.0
        %851 = vmatprep.subr.mxu0 0.0
        %852 = vmatpush1.xpose.msra.mxu0 0.0
        %853 = vmatprep.subr.mxu0 0.0
        %854 = vmatpush1.xpose.msra.mxu0 0.0
        %855 = vmatprep.subr.mxu0 0.0
        %856 = vmatpush1.xpose.msra.mxu0 0.0
        %857 = vmatprep.subr.mxu0 0.0
        %858 = vmatpush1.xpose.msra.mxu0 0.0
        %859 = vmatprep.subr.mxu0 0.0
        %860 = vmatpush1.xpose.msra.mxu0 0.0
        %861 = vmatprep.subr.mxu0 0.0
        %862 = vmatpush1.xpose.msra.mxu0 0.0
        %863 = vmatprep.subr.mxu0 0.0
        %864 = vmatpush1.xpose.msra.mxu0 0.0
        %865 = vmatprep.subr.mxu0 0.0
        %866 = vmatpush1.xpose.msra.mxu0 0.0
        %867 = vmatprep.subr.mxu0 0.0
        %868 = vmatpush1.xpose.msra.mxu0 0.0
        %869 = vmatprep.subr.mxu0 0.0
        %870 = vmatpush1.xpose.msra.mxu0 %v837
        %871 = vmatprep.subr.mxu0 0.0
        %872 = vmatpush2.xpose.msra.mxu0 0.0
        %873 = vmatprep.subr.mxu0 0.0
        %874 = vmatpush2.xpose.msra.mxu0 0.0
        %875 = vmatprep.subr.mxu0 0.0
        %876 = vmatpush2.xpose.msra.mxu0 0.0
        %877 = vmatprep.subr.mxu0 0.0
        %878 = vmatpush2.xpose.msra.mxu0 0.0
        %879 = vmatprep.subr.mxu0 0.0
        %880 = vmatpush2.xpose.msra.mxu0 0.0
        %881 = vmatprep.subr.mxu0 0.0
        %882 = vmatpush2.xpose.msra.mxu0 0.0
        %883 = vmatprep.subr.mxu0 0.0
        %884 = vmatpush2.xpose.msra.mxu0 0.0
        %885 = vmatprep.subr.mxu0 0.0
        %886 = vmatpush2.xpose.msra.mxu0 0.0
        %887 = vmatprep.subr.mxu0 0.0
        %888 = vmatpush2.xpose.msra.mxu0 0.0
        %889 = vmatprep.subr.mxu0 0.0
        %890 = vmatpush2.xpose.msra.mxu0 0.0
        %891 = vmatprep.subr.mxu0 0.0
        %892 = vmatpush2.xpose.msra.mxu0 0.0
        %893 = vmatprep.subr.mxu0 0.0
        %894 = vmatpush2.xpose.msra.mxu0 0.0
        %895 = vmatprep.subr.mxu0 0.0
        %896 = vmatpush2.xpose.msra.mxu0 0.0
        %897 = vmatprep.subr.mxu0 0.0
        %898 = vmatpush2.xpose.msra.mxu0 0.0
        %899 = vmatprep.subr.mxu0 0.0
        %900 = vmatpush2.xpose.msra.mxu0 0.0
        %901 = vmatprep.subr.mxu0 0.0
        %902 = vmatpush2.xpose.msra.mxu0 0.0
        %903 = vmatprep.mubr.f32.mxu0 0.0
        %904 = vmatmul.mubr.f32.gmra.mxu0 %v835
        %v905 = vpop.f32.mrf.mxu0
        %v906 = vadd.f32 0.0, %v905
        %v907 = vpop.f32.mrf.mxu0
        %908 = vdwg.mxu0
        %v909 = vsel %vm325, %v906, -inf
        %910 = vmax.xlane.f32.xlu0 %v909
        %v911 = vpop.xlane.xlu0 %910
        %v912 = vsub.f32 %v906, %v911
        %v913 = vmul.f32 %v912, 1.442695
        %v914 = vpow.pop %v913
        %v915 = vsel %vm325, %v914, 0.0
        %916 = vadd.xlane.f32.xlu0 %v915
        %v917 = vpop.xlane.xlu0 %916
        %918 = vrot.lane.b32.xlu0 %v318, 40
        %v919 = vpop.permute.xlu0 %918
        %v922 = vsel %vm325, %v914, 0
        %924 = vmatprep.subr.mxu0 0.0
        %925 = vmatpush1.msra.mxu0 0.0
        %926 = vmatprep.subr.mxu0 0.0
        %927 = vmatpush1.msra.mxu0 0.0
        %928 = vmatprep.subr.mxu0 0.0
        %929 = vmatpush1.msra.mxu0 0.0
        %930 = vmatprep.subr.mxu0 0.0
        %931 = vmatpush1.msra.mxu0 0.0
        %932 = vmatprep.subr.mxu0 0.0
        %933 = vmatpush1.msra.mxu0 0.0
        %934 = vmatprep.subr.mxu0 0.0
        %935 = vmatpush1.msra.mxu0 0.0
        %936 = vmatprep.subr.mxu0 0.0
        %937 = vmatpush1.msra.mxu0 0.0
        %938 = vmatprep.subr.mxu0 0.0
        %939 = vmatpush1.msra.mxu0 0.0
        %940 = vmatprep.subr.mxu0 0.0
        %941 = vmatpush1.msra.mxu0 0.0
        %942 = vmatprep.subr.mxu0 0.0
        %943 = vmatpush1.msra.mxu0 0.0
        %944 = vmatprep.subr.mxu0 0.0
        %945 = vmatpush1.msra.mxu0 0.0
        %946 = vmatprep.subr.mxu0 0.0
        %947 = vmatpush1.msra.mxu0 0.0
        %948 = vmatprep.subr.mxu0 0.0
        %949 = vmatpush1.msra.mxu0 0.0
        %950 = vmatprep.subr.mxu0 0.0
        %951 = vmatpush1.msra.mxu0 0.0
        %952 = vmatprep.subr.mxu0 0.0
        %953 = vmatpush1.msra.mxu0 0.0
        %954 = vmatprep.subr.mxu0 0.0
        %955 = vmatpush1.msra.mxu0 %v919
        %956 = vmatprep.subr.mxu0 0.0
        %957 = vmatpush2.msra.mxu0 0.0
        %958 = vmatprep.subr.mxu0 0.0
        %959 = vmatpush2.msra.mxu0 0.0
        %960 = vmatprep.subr.mxu0 0.0
        %961 = vmatpush2.msra.mxu0 0.0
        %962 = vmatprep.subr.mxu0 0.0
        %963 = vmatpush2.msra.mxu0 0.0
        %964 = vmatprep.subr.mxu0 0.0
        %965 = vmatpush2.msra.mxu0 0.0
        %966 = vmatprep.subr.mxu0 0.0
        %967 = vmatpush2.msra.mxu0 0.0
        %968 = vmatprep.subr.mxu0 0.0
        %969 = vmatpush2.msra.mxu0 0.0
        %970 = vmatprep.subr.mxu0 0.0
        %971 = vmatpush2.msra.mxu0 0.0
        %972 = vmatprep.subr.mxu0 0.0
        %973 = vmatpush2.msra.mxu0 0.0
        %974 = vmatprep.subr.mxu0 0.0
        %975 = vmatpush2.msra.mxu0 0.0
        %976 = vmatprep.subr.mxu0 0.0
        %977 = vmatpush2.msra.mxu0 0.0
        %978 = vmatprep.subr.mxu0 0.0
        %979 = vmatpush2.msra.mxu0 0.0
        %980 = vmatprep.subr.mxu0 0.0
        %981 = vmatpush2.msra.mxu0 0.0
        %982 = vmatprep.subr.mxu0 0.0
        %983 = vmatpush2.msra.mxu0 0.0
        %984 = vmatprep.subr.mxu0 0.0
        %985 = vmatpush2.msra.mxu0 0.0
        %986 = vmatprep.subr.mxu0 0.0
        %987 = vmatpush2.msra.mxu0 0.0
        %988 = vmatprep.mubr.f32.mxu0 0.0
        %989 = vmatmul.mubr.f32.gmra.mxu0 %v922
        %v990 = vpop.f32.mrf.mxu0
        %v991 = vadd.f32 0.0, %v990
        %v992 = vpop.f32.mrf.mxu0
        %993 = vdwg.mxu0
        %v994 = vrcp.pop %v917
        %v995 = vmul.f32 %v991, %v994
        %997 = vrot.lane.b32.xlu0 %v995, 24
        %v998 = vpop.permute.xlu0 %997
        %vm1000 = vcmask 261312
        %1001 = vst.msk [vmem:[#allocation2] sm:$0xff] %vm1000, %v998
        %v1002 = vld [vmem:[#allocation2] sm:$0xff]
        %v1003 = vld [vmem:[#allocation8] sm:$0xff]
        %v1004 = vld [vmem:[#allocation8 + $0x8] sm:$0xff]
        %v1005 = vld [vmem:[#allocation8 + $0x10] sm:$0xff]
        %v1006 = vld [vmem:[#allocation8 + $0x18] sm:$0xff]
        %v1007 = vld [vmem:[%s3] sm:$0x1]
        %v1009 = vlaneseq
        %v1010 = vshrl.u32 %v1009, 7
        %v1011 = vsub.s32 0, %v1010
        %v1012 = vrot.slane %v1007, %v1011
        %v1015 = vsel %vm247, %v1002, 0
        %1017 = vmatprep.subr.mxu0 0.0
        %1018 = vmatpush1.msra.mxu0 0.0
        %1019 = vmatprep.subr.mxu0 0.0
        %1020 = vmatpush1.msra.mxu0 0.0
        %1021 = vmatprep.subr.mxu0 0.0
        %1022 = vmatpush1.msra.mxu0 0.0
        %1023 = vmatprep.subr.mxu0 0.0
        %1024 = vmatpush1.msra.mxu0 0.0
        %1025 = vmatprep.subr.mxu0 0.0
        %1026 = vmatpush1.msra.mxu0 0.0
        %1027 = vmatprep.subr.mxu0 0.0
        %1028 = vmatpush1.msra.mxu0 0.0
        %1029 = vmatprep.subr.mxu0 0.0
        %1030 = vmatpush1.msra.mxu0 0.0
        %1031 = vmatprep.subr.mxu0 0.0
        %1032 = vmatpush1.msra.mxu0 0.0
        %1033 = vmatprep.subr.mxu0 0.0
        %1034 = vmatpush1.msra.mxu0 0.0
        %1035 = vmatprep.subr.mxu0 0.0
        %1036 = vmatpush1.msra.mxu0 0.0
        %1037 = vmatprep.subr.mxu0 0.0
        %1038 = vmatpush1.msra.mxu0 0.0
        %1039 = vmatprep.subr.mxu0 0.0
        %1040 = vmatpush1.msra.mxu0 0.0
        %1041 = vmatprep.subr.mxu0 0.0
        %1042 = vmatpush1.msra.mxu0 %v1006
        %1043 = vmatprep.subr.mxu0 0.0
        %1044 = vmatpush1.msra.mxu0 %v1005
        %1045 = vmatprep.subr.mxu0 0.0
        %1046 = vmatpush1.msra.mxu0 %v1004
        %1047 = vmatprep.subr.mxu0 0.0
        %1048 = vmatpush1.msra.mxu0 %v1003
        %1049 = vmatprep.subr.mxu0 0.0
        %1050 = vmatpush2.msra.mxu0 0.0
        %1051 = vmatprep.subr.mxu0 0.0
        %1052 = vmatpush2.msra.mxu0 0.0
        %1053 = vmatprep.subr.mxu0 0.0
        %1054 = vmatpush2.msra.mxu0 0.0
        %1055 = vmatprep.subr.mxu0 0.0
        %1056 = vmatpush2.msra.mxu0 0.0
        %1057 = vmatprep.subr.mxu0 0.0
        %1058 = vmatpush2.msra.mxu0 0.0
        %1059 = vmatprep.subr.mxu0 0.0
        %1060 = vmatpush2.msra.mxu0 0.0
        %1061 = vmatprep.subr.mxu0 0.0
        %1062 = vmatpush2.msra.mxu0 0.0
        %1063 = vmatprep.subr.mxu0 0.0
        %1064 = vmatpush2.msra.mxu0 0.0
        %1065 = vmatprep.subr.mxu0 0.0
        %1066 = vmatpush2.msra.mxu0 0.0
        %1067 = vmatprep.subr.mxu0 0.0
        %1068 = vmatpush2.msra.mxu0 0.0
        %1069 = vmatprep.subr.mxu0 0.0
        %1070 = vmatpush2.msra.mxu0 0.0
        %1071 = vmatprep.subr.mxu0 0.0
        %1072 = vmatpush2.msra.mxu0 0.0
        %1073 = vmatprep.subr.mxu0 0.0
        %1074 = vmatpush2.msra.mxu0 0.0
        %1075 = vmatprep.subr.mxu0 0.0
        %1076 = vmatpush2.msra.mxu0 0.0
        %1077 = vmatprep.subr.mxu0 0.0
        %1078 = vmatpush2.msra.mxu0 0.0
        %1079 = vmatprep.subr.mxu0 0.0
        %1080 = vmatpush2.msra.mxu0 0.0
        %1081 = vmatprep.mubr.f32.mxu0 0.0
        %1082 = vmatmul.mubr.f32.gmra.mxu0 %v1015
        %v1083 = vpop.f32.mrf.mxu0
        %v1084 = vadd.f32 %v1012, %v1083
        %v1085 = vpop.f32.mrf.mxu0
        %1086 = vdwg.mxu0
        %1087 = vst.msk [vmem:[%s241] sm:$0xff] %vm247, %v1084
        %s1088 = sand.u32 %s119, 1
        %s1089 = scalar_lea.sflag [#allocation5], %s1088
        %s1090 = sand.u32 %s119, 1
        %s1091 = smul.addr %s1090, 8
        %s1092 = scalar_lea.vmem [#allocation9], %s1091
        // Predicated region
        $region49: #{tpu_custom_call.1} parent=35 // pred_check
          %p1093 = pneg %p129
        $region50: #{tpu_custom_call.1} parent=35 // pred_check_branch
          %1095 = sbr.rel (%p1093) target = $region52
        $region51: #{tpu_custom_call.1} parent=35 // pred_region
          %s1097 = ssub.s32 128, 128
          %1098 = vsyncadd %s1089, %s1097
          %s1099 = smul.addr %s22, 128
          %s1100 = scalar_lea.hbm %s4, %s1099
          %s1102 = sshll.u32 %s1092, 4
          %s1103 = int_to_ptr.vmem [resolvable:$true] %s1102
          %1105 = dma.vmem_to_hbm [thread:$0]  %s1103, 128, %s1100, %s1089
        $region52: #{tpu_custom_call.1} parent=35 // pred_fallthru
          _
      $region36: #{tpu_custom_call.1} parent=5 // pred_fallthru
        _
      %p1106 = scmp.le.s32.totalorder 2, %s17
      // Predicated region
      $region53: #{tpu_custom_call.1} parent=5 // pred_check
        %p1107 = pneg %p1106
      $region54: #{tpu_custom_call.1} parent=5 // pred_check_branch
        %1109 = sbr.rel (%p1107) target = $region56
      $region55: #{tpu_custom_call.1} parent=5 // pred_region
        %s1110 = ssub.s32 %s17, 2
        // Predicated region
        $region57: #{tpu_custom_call.1} parent=55 // pred_check
          %p1111 = pneg %p135
        $region58: #{tpu_custom_call.1} parent=55 // pred_check_branch
          %1113 = sbr.rel (%p1111) target = $region60
        $region59: #{tpu_custom_call.1} parent=55 // pred_region
          %s1114 = sand.u32 %s120, 1
          %s1115 = scalar_lea.sflag [#allocation5], %s1114
          %s1116 = sand.u32 %s120, 1
          %s1117 = smul.addr %s1116, 8
          %s1118 = scalar_lea.vmem [#allocation9], %s1117
          %1119 = dma.done %s1115, 128
        $region60: #{tpu_custom_call.1} parent=55 // pred_fallthru
          _
      $region56: #{tpu_custom_call.1} parent=5 // pred_fallthru
        _
    $region6: #{tpu_custom_call.1} parent=1 // loop_footer
      %s21 = sadd.s32 1, %s17
    $region7: #{tpu_custom_call.1} parent=1 // loop_footer_branch
      %16 = sbr.rel target = $region3
    $region8: #{tpu_custom_call.1} parent=1 // loop_exit
      _
    %1120 = vsyncpa [#allocation4], 1
    %s1121 = scalar_lea.sflag [#allocation4], 1
    %1122 = vsyncpa %s1121, 1
    %1123 = vsyncpa [#allocation7], 1
    %1124 = vsyncpa [#allocation5], 1
    %s1125 = scalar_lea.sflag [#allocation5], 1
    %1126 = vsyncpa %s1125, 1

</llo_original>
